<compile_context>
chip_gen: v7x
topology: tpu7x:2x2x1
jax: 0.10.0
libtpu: 0.0.40
codegen_flags: <defaults>
</compile_context>

<pallas_src>
import functools

import jax
import jax.numpy as jnp
from jax.experimental import pallas as pl
from jax.experimental.pallas import tpu as pltpu


# Pad logit placed on class 0 of padded positions: softmax denom rounds to 1.0
# in f32, so logpt == 0, pt == 1 and the padded loss is exactly zero for every
# gamma / alpha combination (no runtime mask needed).
_PAD_LOGIT = 60.0


# ---------------------------------------------------------------------------
# Shared per-tile math (class axis = `axis`).
# ---------------------------------------------------------------------------
def _focal_core(x, t, a, *, axis, gamma, use_alpha):
    """x: f32 logits with the class axis at `axis`; t: int32 targets
    broadcastable against x with size-1 class axis; a: f32 per-class weights
    broadcastable against x.  Returns the per-position loss (class axis = 1)."""
    m = jnp.max(x, axis=axis, keepdims=True)
    s = x - m
    exp_s = jnp.exp(s)
    denom = jnp.sum(exp_s, axis=axis, keepdims=True)
    lse = jnp.log(denom)

    cls = jax.lax.broadcasted_iota(jnp.int32, x.shape, axis)
    sel = cls == t                                              # bool mask

    # gather(1, target) without materializing log-softmax or a float one-hot.
    logpt = jnp.sum(jnp.where(sel, s, 0.0), axis=axis, keepdims=True) - lse
    # Reuse exp(s): pt = softmax(x)[target] (exact divide keeps tolerances).
    pt = jnp.sum(jnp.where(sel, exp_s, 0.0), axis=axis, keepdims=True) / denom

    if use_alpha:
        at = jnp.sum(jnp.where(sel, a, 0.0), axis=axis, keepdims=True)
        logpt = logpt * at

    g = float(gamma)
    if g == 0.0:
        return -logpt
    one_m_pt = 1.0 - pt
    if g.is_integer() and 1.0 <= g <= 8.0:
        w = one_m_pt
        for _ in range(int(g) - 1):          # plain VPU multiplies
            w = w * one_m_pt
    else:
        w = one_m_pt ** g                    # transcendental pow
    return -(w * logpt)


# ---------------------------------------------------------------------------
# Kernel A: NCHW-style layout, classes on sublanes, spatial on lanes.
# ---------------------------------------------------------------------------
def _focal_loss_chw_kernel(x_ref, t_ref, a_ref, out_ref, *, gamma, use_alpha):
    x = x_ref[0].astype(jnp.float32)         # (C, T)
    t = t_ref[0]                             # (1, T) int32
    a = a_ref[...].astype(jnp.float32)       # (C, 1)
    loss = _focal_core(x, t, a, axis=0, gamma=gamma, use_alpha=use_alpha)
    # Per-(b, j) partial sum: one small XLU lane reduce per step, no carry.
    out_ref[...] = jnp.sum(loss, axis=1, keepdims=True)[None, None]   # (1,1,1,1)


# ---------------------------------------------------------------------------
# Kernel B: [N, C] layout with large C, classes on lanes (no wrapper transpose).
# ---------------------------------------------------------------------------
def _focal_loss_rows_kernel(x_ref, t_ref, a_ref, out_ref, *, gamma, use_alpha):
    x = x_ref[...].astype(jnp.float32)       # (tn, C)
    t = t_ref[...]                           # (tn, 1) int32
    a = a_ref[...].astype(jnp.float32)       # (1, C)
    loss = _focal_core(x, t, a, axis=1, gamma=gamma, use_alpha=use_alpha)
    out_ref[...] = jnp.sum(loss, axis=0, keepdims=True)[None]         # (1,1,1)


# ---------------------------------------------------------------------------
# VMEM-aware tile sizing.
# ---------------------------------------------------------------------------
def _vmem_capacity_bytes():
    try:
        return int(pltpu.get_tpu_info().vmem_capacity_bytes)
    except Exception:
        return 64 * 1024 * 1024              # conservative (v7x per-TC VMEM)


def _vmem_limit_bytes():
    return int(min(_vmem_capacity_bytes() * 3 // 4, 96 * 1024 * 1024))


def _pick_tile_lanes(C, hw, itemsize):
    """Largest lane tile (multiple of 128, <= 32768) whose footprint —
    double-buffered inputs + ~4 live (C, T) f32 intermediates + a few (1, T)
    rows — fits in half the scoped VMEM limit of the current chip."""
    vmem_limit = _vmem_limit_bytes()
    per_lane = (2 * C * itemsize             # logits, double-buffered
                + 2 * 4                      # int32 targets, double-buffered
                + 4 * C * 4                  # live (C, T) f32 temporaries
                + 8 * 4)                     # (1, T) f32 rows
    budget = vmem_limit // 2
    t = (budget // per_lane // 128) * 128
    t = int(max(128, min(32768, t)))
    hw_128 = -(-hw // 128) * 128
    return min(t, hw_128), vmem_limit


def _pick_tile_rows(C, n, itemsize):
    vmem_limit = _vmem_limit_bytes()
    per_row = 2 * C * itemsize + 2 * 4 + 4 * C * 4 + 8 * 4
    budget = vmem_limit // 2
    t = (budget // per_row // 8) * 8
    t = int(max(8, min(4096, t)))
    n_8 = -(-n // 8) * 8
    return min(t, n_8), vmem_limit


# ---------------------------------------------------------------------------
# Wrappers around pallas_call.
# ---------------------------------------------------------------------------
def _focal_sum_chw(x, t, alpha_col, gamma, use_alpha, tile_hw):
    B, C, HW = x.shape
    auto_tile, vmem_limit = _pick_tile_lanes(C, HW, x.dtype.itemsize)
    if tile_hw is None:
        tile = auto_tile
    else:
        tile = max(128, (int(tile_hw) // 128) * 128)
        tile = min(tile, -(-HW // 128) * 128)

    hw_pad = (-HW) % tile
    if hw_pad:
        pad = jnp.zeros((B, C, hw_pad), x.dtype)
        pad = pad.at[:, 0, :].set(jnp.asarray(_PAD_LOGIT, x.dtype))
        x = jnp.concatenate([x, pad], axis=2)
        t = jnp.pad(t, ((0, 0), (0, 0), (0, hw_pad)))      # padded targets = 0
    n_j = (HW + hw_pad) // tile

    kernel = functools.partial(_focal_loss_chw_kernel,
                               gamma=float(gamma), use_alpha=use_alpha)
    partials = pl.pallas_call(
        kernel,
        out_shape=jax.ShapeDtypeStruct((B, n_j, 1, 1), jnp.float32),
        grid_spec=pltpu.PrefetchScalarGridSpec(
            num_scalar_prefetch=0,
            grid=(B, n_j),
            in_specs=[
                pl.BlockSpec((1, C, tile), lambda b, j: (b, 0, j)),
                pl.BlockSpec((1, 1, tile), lambda b, j: (b, 0, j)),
                pl.BlockSpec((C, 1), lambda b, j: (0, 0)),
            ],
            out_specs=pl.BlockSpec((1, 1, 1, 1), lambda b, j: (b, j, 0, 0)),
        ),
        compiler_params=pltpu.CompilerParams(
            dimension_semantics=("parallel", "parallel"),
            vmem_limit_bytes=vmem_limit,
        ),
    )(x, t, alpha_col)
    return jnp.sum(partials)


def _focal_sum_rows(x, t, alpha_row, gamma, use_alpha, tile_n):
    N, C = x.shape
    auto_tn, vmem_limit = _pick_tile_rows(C, N, x.dtype.itemsize)
    tn = auto_tn if tile_n is None else max(8, (int(tile_n) // 8) * 8)
    tn = min(tn, -(-N // 8) * 8)

    n_pad = (-N) % tn
    if n_pad:
        pad = jnp.zeros((n_pad, C), x.dtype)
        pad = pad.at[:, 0].set(jnp.asarray(_PAD_LOGIT, x.dtype))
        x = jnp.concatenate([x, pad], axis=0)
        t = jnp.pad(t, ((0, n_pad), (0, 0)))
    n_i = (N + n_pad) // tn

    kernel = functools.partial(_focal_loss_rows_kernel,
                               gamma=float(gamma), use_alpha=use_alpha)
    partials = pl.pallas_call(
        kernel,
        out_shape=jax.ShapeDtypeStruct((n_i, 1, 1), jnp.float32),
        grid_spec=pltpu.PrefetchScalarGridSpec(
            num_scalar_prefetch=0,
            grid=(n_i,),
            in_specs=[
                pl.BlockSpec((tn, C), lambda i: (i, 0)),
                pl.BlockSpec((tn, 1), lambda i: (i, 0)),
                pl.BlockSpec((1, C), lambda i: (0, 0)),
            ],
            out_specs=pl.BlockSpec((1, 1, 1), lambda i: (i, 0, 0)),
        ),
        compiler_params=pltpu.CompilerParams(
            dimension_semantics=("parallel",),
            vmem_limit_bytes=vmem_limit,
        ),
    )(x, t, alpha_row)
    return jnp.sum(partials)


def _alpha_vector(alpha, C):
    if alpha is None:
        return False, jnp.ones((C,), jnp.float32)
    if isinstance(alpha, (float, int)) and not isinstance(alpha, bool):
        if C != 2:
            raise ValueError("scalar alpha implies binary classification (C == 2)")
        return True, jnp.array([float(alpha), 1.0 - float(alpha)], jnp.float32)
    return True, jnp.asarray(alpha, jnp.float32).reshape(C)


def focal_loss(inputs, target, *, gamma=0.0, alpha=None, size_average=True,
               tile_hw=None):
    """Pallas TPU implementation of FocalLoss.forward.

    inputs: [N, C] or [B, C, *spatial] float logits (f32 or bf16 — feeding
            bf16 halves the dominant HBM stream; upcast happens in-kernel).
    target: integer class indices with B*prod(spatial) (or N) elements.
    alpha : None, python scalar (-> [alpha, 1-alpha], requires C==2), or a
            per-class weight list/array of length C.
    """
    inputs = jnp.asarray(inputs)
    target = jnp.asarray(target)
    if inputs.ndim < 2:
        raise ValueError("inputs must be at least 2-D ([N, C] or [B, C, ...])")
    C = inputs.shape[1]
    use_alpha, alpha_vec = _alpha_vector(alpha, C)

    if inputs.ndim > 2:
        B = inputs.shape[0]
        x = inputs.reshape(B, C, -1)                       # (B, C, HW): no transpose
        HW = x.shape[2]
        n_rows = B * HW
        t = target.reshape(B, 1, HW).astype(jnp.int32)
        loss_sum = _focal_sum_chw(x, t, alpha_vec.reshape(C, 1),
                                  gamma, use_alpha, tile_hw)
    else:
        N = inputs.shape[0]
        n_rows = N
        t2 = target.reshape(N, 1).astype(jnp.int32)
        if C >= 128:
            # Classes on lanes: no wrapper transpose, single HBM pass.
            loss_sum = _focal_sum_rows(inputs, t2, alpha_vec.reshape(1, C),
                                       gamma, use_alpha, tile_hw)
        else:
            # Tiny C: one transpose so classes land on sublanes, spatial on lanes.
            x = inputs.T.reshape(1, C, N)
            t = t2.reshape(1, 1, N)
            loss_sum = _focal_sum_chw(x, t, alpha_vec.reshape(C, 1),
                                      gamma, use_alpha, tile_hw)

    if size_average:
        return loss_sum / n_rows
    return loss_sum


# ---------------------------------------------------------------------------
# Plain-JAX reference (mirrors the PyTorch forward).
# ---------------------------------------------------------------------------
def _focal_loss_ref(inputs, target, *, gamma, alpha, size_average):
    inputs = jnp.asarray(inputs)
    if inputs.ndim > 2:
        B, C = inputs.shape[0], inputs.shape[1]
        inputs = inputs.reshape(B, C, -1).transpose(0, 2, 1).reshape(-1, C)
    N, C = inputs.shape
    target = jnp.asarray(target).reshape(-1).astype(jnp.int32)
    logp = jax.nn.log_softmax(inputs.astype(jnp.float32), axis=1)
    logpt = jnp.take_along_axis(logp, target[:, None], axis=1)[:, 0]
    pt = jnp.exp(logpt)
    if alpha is not None:
        if isinstance(alpha, (float, int)) and not isinstance(alpha, bool):
            a = jnp.array([float(alpha), 1.0 - float(alpha)], dtype=jnp.float32)
        else:
            a = jnp.asarray(alpha, dtype=jnp.float32).reshape(-1)
        logpt = logpt * a[target]
    loss = -1.0 * (1.0 - pt) ** gamma * logpt
    return loss.mean() if size_average else loss.sum()


if __name__ == "__main__":
    key = jax.random.PRNGKey(0)
    k1, k2, k3, k4, k5, k6 = jax.random.split(key, 6)

    # ---- Case 1: NCHW, gamma=2 (integer fast-path), per-class alpha, mean.
    B, C, H, W = 2, 4, 16, 16
    logits = jax.random.normal(k1, (B, C, H, W), dtype=jnp.float32)
    target = jax.random.randint(k2, (B, H, W), 0, C, dtype=jnp.int32)
    alpha = [0.25, 0.75, 0.5, 0.5]
    out = focal_loss(logits, target, gamma=2.0, alpha=alpha, size_average=True)
    out = jax.block_until_ready(out)
    ref = _focal_loss_ref(logits, target, gamma=2.0, alpha=alpha,
                          size_average=True)
    assert jnp.allclose(out, ref, rtol=1e-5, atol=1e-6), (out, ref)

    # ---- Case 2: NCHW, gamma=0, no alpha, sum reduction.
    out2 = focal_loss(logits, target, gamma=0.0, alpha=None, size_average=False)
    out2 = jax.block_until_ready(out2)
    ref2 = _focal_loss_ref(logits, target, gamma=0.0, alpha=None,
                           size_average=False)
    assert jnp.allclose(out2, ref2, rtol=1e-5, atol=1e-5), (out2, ref2)

    # ---- Case 3: scalar alpha (C==2), gamma=0, small spatial -> exercises the
    #      pad-value trick with the alpha path (padded loss must be exactly 0).
    logits3 = jax.random.normal(k3, (1, 2, 8, 8), dtype=jnp.float32)
    target3 = jax.random.randint(k4, (1, 8, 8), 0, 2, dtype=jnp.int32)
    out3 = focal_loss(logits3, target3, gamma=0.0, alpha=0.25, size_average=True)
    out3 = jax.block_until_ready(out3)
    ref3 = _focal_loss_ref(logits3, target3, gamma=0.0, alpha=0.25,
                           size_average=True)
    assert jnp.allclose(out3, ref3, rtol=1e-5, atol=1e-6), (out3, ref3)

    # ---- Case 4: 2-D [N, C] with C >= 128 (classes-on-lanes kernel, no
    #      wrapper transpose), non-integer gamma, mean.
    N4, C4 = 300, 128
    logits4 = jax.random.normal(k5, (N4, C4), dtype=jnp.float32)
    target4 = jax.random.randint(k6, (N4,), 0, C4, dtype=jnp.int32)
    out4 = focal_loss(logits4, target4, gamma=1.5, alpha=None, size_average=True)
    out4 = jax.block_until_ready(out4)
    ref4 = _focal_loss_ref(logits4, target4, gamma=1.5, alpha=None,
                           size_average=True)
    assert jnp.allclose(out4, ref4, rtol=1e-5, atol=1e-6), (out4, ref4)

    print("KERNEL_OK")
</pallas_src>

<mosaic_0001>
module attributes {stable_mosaic.version = 11 : i64} {
  func.func @_focal_loss_chw_kernel(%arg0: i32, %arg1: i32, %arg2: memref<1x4x256xf32, #tpu.memory_space<vmem>>, %arg3: memref<1x1x256xi32, #tpu.memory_space<vmem>>, %arg4: memref<4x1xf32, #tpu.memory_space<vmem>>, %arg5: memref<1x1x1x1xf32, #tpu.memory_space<vmem>>) attributes {dimension_semantics = [#tpu.dimension_semantics<parallel>, #tpu.dimension_semantics<parallel>], iteration_bounds = array<i64: 2, 1>, scalar_prefetch = 0 : i64, scratch_operands = 0 : i64, tpu.core_type = #tpu.core_type<tc>, window_params = [{transform_indices = @transform_0, window_bounds = array<i64: 1, 4, 256>}, {transform_indices = @transform_1, window_bounds = array<i64: 1, 1, 256>}, {pipeline_mode = #tpu.pipeline_mode<synchronous>, transform_indices = @transform_2, window_bounds = array<i64: 4, 1>}, {transform_indices = @transform_3, window_bounds = array<i64: 1, 1, 1, 1>}]} {
    %c0 = arith.constant 0 : index
    %c0_0 = arith.constant 0 : index
    %c0_1 = arith.constant 0 : index
    %0 = vector.load %arg2[%c0, %c0_0, %c0_1] : memref<1x4x256xf32, #tpu.memory_space<vmem>>, vector<1x4x256xf32>
    %1 = vector.shape_cast %0 : vector<1x4x256xf32> to vector<4x256xf32>
    %c0_2 = arith.constant 0 : index
    %c0_3 = arith.constant 0 : index
    %c0_4 = arith.constant 0 : index
    %2 = vector.load %arg3[%c0_2, %c0_3, %c0_4] : memref<1x1x256xi32, #tpu.memory_space<vmem>>, vector<1x1x256xi32>
    %3 = vector.shape_cast %2 : vector<1x1x256xi32> to vector<1x256xi32>
    %c0_5 = arith.constant 0 : index
    %c0_6 = arith.constant 0 : index
    %4 = vector.load %arg4[%c0_5, %c0_6] : memref<4x1xf32, #tpu.memory_space<vmem>>, vector<4x1xf32>
    %cst = arith.constant dense<0xFF800000> : vector<256xf32>
    %5 = vector.multi_reduction <maximumf>, %1, %cst [0] : vector<4x256xf32> to vector<256xf32>
    %6 = vector.shape_cast %5 : vector<256xf32> to vector<1x256xf32>
    %7 = vector.broadcast %6 : vector<1x256xf32> to vector<4x256xf32>
    %8 = arith.subf %1, %7 : vector<4x256xf32>
    %9 = math.exp %8 : vector<4x256xf32>
    %cst_7 = arith.constant dense<0.000000e+00> : vector<256xf32>
    %10 = vector.multi_reduction <add>, %9, %cst_7 [0] : vector<4x256xf32> to vector<256xf32>
    %11 = vector.shape_cast %10 : vector<256xf32> to vector<1x256xf32>
    %12 = math.log %11 : vector<1x256xf32>
    %13 = tpu.iota {dimensions = array<i32: 0>} : vector<4x256xi32>
    %14 = vector.broadcast %3 : vector<1x256xi32> to vector<4x256xi32>
    %15 = arith.cmpi eq, %13, %14 : vector<4x256xi32>
    %cst_8 = arith.constant 0.000000e+00 : f32
    %16 = vector.broadcast %cst_8 : f32 to vector<4x256xf32>
    %17 = arith.select %15, %8, %16 : vector<4x256xi1>, vector<4x256xf32>
    %cst_9 = arith.constant dense<0.000000e+00> : vector<256xf32>
    %18 = vector.multi_reduction <add>, %17, %cst_9 [0] : vector<4x256xf32> to vector<256xf32>
    %19 = vector.shape_cast %18 : vector<256xf32> to vector<1x256xf32>
    %20 = arith.subf %19, %12 : vector<1x256xf32>
    %cst_10 = arith.constant 0.000000e+00 : f32
    %21 = vector.broadcast %cst_10 : f32 to vector<4x256xf32>
    %22 = arith.select %15, %9, %21 : vector<4x256xi1>, vector<4x256xf32>
    %cst_11 = arith.constant dense<0.000000e+00> : vector<256xf32>
    %23 = vector.multi_reduction <add>, %22, %cst_11 [0] : vector<4x256xf32> to vector<256xf32>
    %24 = vector.shape_cast %23 : vector<256xf32> to vector<1x256xf32>
    %25 = arith.divf %24, %11 : vector<1x256xf32>
    %cst_12 = arith.constant 0.000000e+00 : f32
    %26 = vector.shape_cast %4 : vector<4x1xf32> to vector<4x1xf32>
    %27 = vector.broadcast %26 : vector<4x1xf32> to vector<4x256xf32>
    %28 = vector.broadcast %cst_12 : f32 to vector<4x256xf32>
    %29 = arith.select %15, %27, %28 : vector<4x256xi1>, vector<4x256xf32>
    %cst_13 = arith.constant dense<0.000000e+00> : vector<256xf32>
    %30 = vector.multi_reduction <add>, %29, %cst_13 [0] : vector<4x256xf32> to vector<256xf32>
    %31 = vector.shape_cast %30 : vector<256xf32> to vector<1x256xf32>
    %32 = arith.mulf %20, %31 : vector<1x256xf32>
    %cst_14 = arith.constant 1.000000e+00 : f32
    %33 = vector.broadcast %cst_14 : f32 to vector<1x256xf32>
    %34 = arith.subf %33, %25 : vector<1x256xf32>
    %35 = arith.mulf %34, %34 : vector<1x256xf32>
    %36 = arith.mulf %35, %32 : vector<1x256xf32>
    %cst_15 = arith.constant 0.000000e+00 : f32
    %37 = vector.broadcast %cst_15 : f32 to vector<1x256xf32>
    %38 = arith.subf %37, %36 : vector<1x256xf32>
    %cst_16 = arith.constant dense<0.000000e+00> : vector<1xf32>
    %39 = vector.multi_reduction <add>, %38, %cst_16 [1] : vector<1x256xf32> to vector<1xf32>
    %40 = vector.shape_cast %39 : vector<1xf32> to vector<1x1xf32>
    %41 = vector.shape_cast %40 : vector<1x1xf32> to vector<1x1x1x1xf32>
    %c0_17 = arith.constant 0 : index
    %c0_18 = arith.constant 0 : index
    %c0_19 = arith.constant 0 : index
    %c0_20 = arith.constant 0 : index
    %42 = vector.load %arg5[%c0_17, %c0_18, %c0_19, %c0_20] : memref<1x1x1x1xf32, #tpu.memory_space<vmem>>, vector<1x1x1x1xf32>
    tpu.vector_store %arg5[%c0_17, %c0_18, %c0_19, %c0_20], %41 {strides = array<i32>} : memref<1x1x1x1xf32, #tpu.memory_space<vmem>>, vector<1x1x1x1xf32>,
    return
  }
  func.func @transform_0(%arg0: i32, %arg1: i32) -> (i32, i32, i32) {
    %c0_i32 = arith.constant 0 : i32
    %c0_i32_0 = arith.constant 0 : i32
    return %arg0, %c0_i32, %arg1 : i32, i32, i32
  }
  func.func @transform_1(%arg0: i32, %arg1: i32) -> (i32, i32, i32) {
    %c0_i32 = arith.constant 0 : i32
    %c0_i32_0 = arith.constant 0 : i32
    return %arg0, %c0_i32, %arg1 : i32, i32, i32
  }
  func.func @transform_2(%arg0: i32, %arg1: i32) -> (i32, i32) {
    %c0_i32 = arith.constant 0 : i32
    %c0_i32_0 = arith.constant 0 : i32
    %c0_i32_1 = arith.constant 0 : i32
    return %c0_i32, %c0_i32_0 : i32, i32
  }
  func.func @transform_3(%arg0: i32, %arg1: i32) -> (i32, i32, i32, i32) {
    %c0_i32 = arith.constant 0 : i32
    %c0_i32_0 = arith.constant 0 : i32
    %c0_i32_1 = arith.constant 0 : i32
    return %arg0, %arg1, %c0_i32, %c0_i32_0 : i32, i32, i32, i32
  }
}

</mosaic_0001>

<llo_original>
// kernel: tpu_custom_call.1
$region0: #{tpu_custom_call.1}
  #allocation0 [shape = 'u32[]', space=smem, size = 0x4, offset = 0x4, fixed_abs, tag = 'smem constant byte address 0x4 - core index']
  #allocation1 [shape = 'u32[144,128]{1,0:T(1,128)}', space=vmem, size = 0x12000, scoped, tag = 'internal scratch']
  %s0 = inlined_call_operand.hbm [shape: f32[2,4,256], index: 0, kind: input, shape index: {}]
  %s1 = inlined_call_operand.vmem [shape: s32[2,1,256], index: 1, kind: input, shape index: {}]
  %s2 = inlined_call_operand.vmem [shape: f32[4,1], index: 2, kind: input, shape index: {}]
  %s3 = inlined_call_operand.vmem [shape: f32[2,1,1,1], index: 3, kind: output, shape index: {}]
  %s4 = sld [smem:[#allocation0]]
  $region49: #{tpu_custom_call.1} parent=0
    _
  %s6 = ssub.s32 1, %s4
  %s7 = scalar_select 0, %s6, %s4
  $region1: #{tpu_custom_call.1} parent=0
    #allocation2 [shape = 'u8[8192]{0}', space=vmem, size = 0x2000, scoped, tag = 'input window, operand 0']
    #allocation3 [shape = 's32[2]{0}', space=sflag, size = 0x8, scoped, tag = 'scoped memory for tpu_custom_call.1']
    %8 = vsyncpa [#allocation3], 0
    %s9 = scalar_lea.sflag [#allocation3], 1
    %10 = vsyncpa %s9, 0
    loop: start=0, step=1, limit=4
    $region2: #{tpu_custom_call.1} parent=1 // loop_pre_header
      _
    $region3: #{tpu_custom_call.1} parent=1 // loop_header
      %s12 = sphi 0, %s16
      %p13 = scmp.ge.s32.totalorder %s12, 4
      %s19 = sphi 0, %s31
      %s20 = sphi 0, %s27
      %s21 = sphi 0, %s19
      %s22 = sphi 0, %s20
      %s23 = sphi 0, %s21
      %s24 = sphi 0, %s22
      %s36 = sphi 0, %s38
      %s39 = sphi 0, %s36
      %s40 = sphi 0, %s39
      %s56 = sphi 0, %s40
      %s64 = sphi 0, %s66
      %s67 = sphi 0, %s64
      %s68 = sphi 0, %s67
      %s84 = sphi 0, %s68
      %s88 = sphi 0, %s88
      %s90 = sphi 0, %s88
      %s91 = sphi 0, %s90
      %s105 = sphi 0, %s91
      %s113 = sphi 0, %s115
      %s116 = sphi 0, %s113
      %s117 = sphi 0, %s116
      %s133 = sphi 0, %s117
    $region4: #{tpu_custom_call.1} parent=1 // loop_header_branch
      %15 = sbr.rel (%p13) target = $region8
    $region5: #{tpu_custom_call.1} parent=1 // loop_body
      %s17 = ssub.s32 %s12, 1
      %s18 = ssub.s32 %s12, 2
      %s25 = sadd.s32 1, %s20
      %p26 = scmp.ge.s32.totalorder %s25, 1
      %s27 = scalar_select %p26, 0, %s25
      %s28 = sadd.s32 1, %s19
      %s29 = scalar_select %p26, %s28, %s19
      %p30 = scmp.ge.s32.totalorder %s29, 2
      %s31 = scalar_select %p30, 0, %s29
      %s32 = ssub.s32 %s19, %s31
      %s33 = ssub.s32 %s20, %s27
      %s34 = sor.u32 %s32, %s33
      %p35 = scmp.eq.s32.totalorder %s34, 0
      %s37 = sadd.s32 %s36, 1
      %s38 = scalar_select %p35, %s36, %s37
      %p41 = pneg %p35
      %p42 = scmp.eq.s32.totalorder %s12, 1
      %p43 = por %p41, %p42
      %p44 = scmp.ne.s32.totalorder %s36, %s39
      %p45 = scmp.eq.s32.totalorder %s12, 0
      %p46 = por %p44, %p45
      %p47 = scmp.ne.s32.totalorder %s36, %s39
      %p48 = scmp.eq.s32.totalorder %s17, 1
      %p49 = por %p47, %p48
      %p50 = scmp.ne.s32.totalorder %s39, %s40
      %p51 = scmp.eq.s32.totalorder %s17, 0
      %p52 = por %p50, %p51
      %p53 = scmp.ne.s32.totalorder %s39, %s40
      %p54 = scmp.eq.s32.totalorder %s18, 1
      %p55 = por %p53, %p54
      %p57 = scmp.ne.s32.totalorder %s40, %s56
      %p58 = scmp.eq.s32.totalorder %s18, 0
      %p59 = por %p57, %p58
      %s60 = ssub.s32 %s19, %s31
      %s61 = ssub.s32 %s20, %s27
      %s62 = sor.u32 %s60, %s61
      %p63 = scmp.eq.s32.totalorder %s62, 0
      %s65 = sadd.s32 %s64, 1
      %s66 = scalar_select %p63, %s64, %s65
      %p69 = pneg %p63
      %p70 = scmp.eq.s32.totalorder %s12, 1
      %p71 = por %p69, %p70
      %p72 = scmp.ne.s32.totalorder %s64, %s67
      %p73 = scmp.eq.s32.totalorder %s12, 0
      %p74 = por %p72, %p73
      %p75 = scmp.ne.s32.totalorder %s64, %s67
      %p76 = scmp.eq.s32.totalorder %s17, 1
      %p77 = por %p75, %p76
      %p78 = scmp.ne.s32.totalorder %s67, %s68
      %p79 = scmp.eq.s32.totalorder %s17, 0
      %p80 = por %p78, %p79
      %p81 = scmp.ne.s32.totalorder %s67, %s68
      %p82 = scmp.eq.s32.totalorder %s18, 1
      %p83 = por %p81, %p82
      %p85 = scmp.ne.s32.totalorder %s68, %s84
      %p86 = scmp.eq.s32.totalorder %s18, 0
      %p87 = por %p85, %p86
      %s89 = sadd.s32 %s88, 1
      %p92 = scmp.eq.s32.totalorder %s12, 1
      %p93 = scmp.ne.s32.totalorder %s88, %s90
      %p94 = scmp.eq.s32.totalorder %s12, 0
      %p95 = por %p93, %p94
      %p96 = scmp.ne.s32.totalorder %s88, %s90
      %p97 = scmp.eq.s32.totalorder %s17, 1
      %p98 = por %p96, %p97
      %p99 = scmp.ne.s32.totalorder %s90, %s91
      %p100 = scmp.eq.s32.totalorder %s17, 0
      %p101 = por %p99, %p100
      %p102 = scmp.ne.s32.totalorder %s90, %s91
      %p103 = scmp.eq.s32.totalorder %s18, 1
      %p104 = por %p102, %p103
      %p106 = scmp.ne.s32.totalorder %s91, %s105
      %p107 = scmp.eq.s32.totalorder %s18, 0
      %p108 = por %p106, %p107
      %s109 = ssub.s32 %s19, %s31
      %s110 = ssub.s32 %s20, %s27
      %s111 = sor.u32 %s109, %s110
      %p112 = scmp.eq.s32.totalorder %s111, 0
      %s114 = sadd.s32 %s113, 1
      %s115 = scalar_select %p112, %s113, %s114
      %p118 = pneg %p112
      %p119 = scmp.eq.s32.totalorder %s12, 1
      %p120 = por %p118, %p119
      %p121 = scmp.ne.s32.totalorder %s113, %s116
      %p122 = scmp.eq.s32.totalorder %s12, 0
      %p123 = por %p121, %p122
      %p124 = scmp.ne.s32.totalorder %s113, %s116
      %p125 = scmp.eq.s32.totalorder %s17, 1
      %p126 = por %p124, %p125
      %p127 = scmp.ne.s32.totalorder %s116, %s117
      %p128 = scmp.eq.s32.totalorder %s17, 0
      %p129 = por %p127, %p128
      %p130 = scmp.ne.s32.totalorder %s116, %s117
      %p131 = scmp.eq.s32.totalorder %s18, 1
      %p132 = por %p130, %p131
      %p134 = scmp.ne.s32.totalorder %s117, %s133
      %p135 = scmp.eq.s32.totalorder %s18, 0
      %p136 = por %p134, %p135
      %p137 = scmp.le.s32.totalorder 1, %s12
      %p138 = scmp.lt.s32.totalorder %s12, 3
      %p139 = pnand %p137, %p138
      %p140 = pneg %p139
      // Predicated region
      $region9: #{tpu_custom_call.1} parent=5 // pred_check
        _
      $region10: #{tpu_custom_call.1} parent=5 // pred_check_branch
        %142 = sbr.rel (%p139) target = $region12
      $region11: #{tpu_custom_call.1} parent=5 // pred_region
        %s143 = ssub.s32 %s12, 1
        // Predicated region
        $region13: #{tpu_custom_call.1} parent=11 // pred_check
          %p144 = pneg %p101
        $region14: #{tpu_custom_call.1} parent=11 // pred_check_branch
          %146 = sbr.rel (%p144) target = $region16
        $region15: #{tpu_custom_call.1} parent=11 // pred_region
          _
        $region16: #{tpu_custom_call.1} parent=11 // pred_fallthru
          _
      $region12: #{tpu_custom_call.1} parent=5 // pred_fallthru
        _
      %p147 = scmp.lt.s32.totalorder %s12, 2
      // Predicated region
      $region17: #{tpu_custom_call.1} parent=5 // pred_check
        %p148 = pneg %p147
      $region18: #{tpu_custom_call.1} parent=5 // pred_check_branch
        %150 = sbr.rel (%p148) target = $region20
      $region19: #{tpu_custom_call.1} parent=5 // pred_region
        // Predicated region
        $region21: #{tpu_custom_call.1} parent=19 // pred_check
          %p151 = pneg %p46
        $region22: #{tpu_custom_call.1} parent=19 // pred_check_branch
          %153 = sbr.rel (%p151) target = $region24
        $region23: #{tpu_custom_call.1} parent=19 // pred_region
          %s154 = sand.u32 %s36, 1
          %s155 = scalar_lea.sflag [#allocation3], %s154
          %s156 = sand.u32 %s36, 1
          %s157 = smul.addr %s156, 8
          %s158 = scalar_lea.vmem [#allocation2], %s157
          %s159 = smul.u32 2, %s20
          %s161 = ssub.s32 128, 128
          %162 = vsyncadd %s155, %s161
          %s163 = smul.addr %s19, 2
          %s164 = sadd.s32 %s159, %s163
          %s165 = smul.addr %s164, 64
          %s166 = scalar_lea.hbm %s0, %s165
          %s168 = sshll.u32 %s158, 4
          %s169 = int_to_ptr.vmem [resolvable:$true] %s168
          %171 = dma.hbm_to_vmem [thread:$0]  %s166, 128, %s169, %s155
        $region24: #{tpu_custom_call.1} parent=19 // pred_fallthru
          _
        // Predicated region
        $region25: #{tpu_custom_call.1} parent=19 // pred_check
          %p172 = pneg %p74
        $region26: #{tpu_custom_call.1} parent=19 // pred_check_branch
          %174 = sbr.rel (%p172) target = $region28
        $region27: #{tpu_custom_call.1} parent=19 // pred_region
          %s175 = smul.u32 2, %s20
          %p176 = scmp.lt.s32.totalorder %s19, 1
          %s177 = scalar_select %p176, %s19, 1
          %p178 = scmp.lt.s32.totalorder %s175, 1
          %s179 = scalar_select %p178, %s175, 1
          %s180 = smul.addr %s177, 2
          %s181 = sadd.s32 %s179, %s180
          %s182 = scalar_lea.vmem %s1, %s181
          %s183 = smul.u32 2, %s20
        $region28: #{tpu_custom_call.1} parent=19 // pred_fallthru
          _
      $region20: #{tpu_custom_call.1} parent=5 // pred_fallthru
        _
      %p184 = scmp.le.s32.totalorder 1, %s12
      %p185 = scmp.lt.s32.totalorder %s12, 3
      %p186 = pnand %p184, %p185
      %p187 = pneg %p186
      // Predicated region
      $region29: #{tpu_custom_call.1} parent=5 // pred_check
        _
      $region30: #{tpu_custom_call.1} parent=5 // pred_check_branch
        %189 = sbr.rel (%p186) target = $region32
      $region31: #{tpu_custom_call.1} parent=5 // pred_region
        %s190 = ssub.s32 %s12, 1
        %s191 = sand.u32 %s39, 1
        %s192 = scalar_lea.sflag [#allocation3], %s191
        %s193 = sand.u32 %s39, 1
        %s194 = smul.addr %s193, 8
        %s195 = scalar_lea.vmem [#allocation2], %s194
        // Predicated region
        $region33: #{tpu_custom_call.1} parent=31 // pred_check
          %p196 = pneg %p52
        $region34: #{tpu_custom_call.1} parent=31 // pred_check_branch
          %198 = sbr.rel (%p196) target = $region36
        $region35: #{tpu_custom_call.1} parent=31 // pred_region
          %199 = dma.done %s192, 128
        $region36: #{tpu_custom_call.1} parent=31 // pred_fallthru
          _
        %s200 = sand.u32 %s39, 1
        %s201 = scalar_lea.sflag [#allocation3], %s200
        %s202 = sand.u32 %s39, 1
        %s203 = smul.addr %s202, 8
        %s204 = scalar_lea.vmem [#allocation2], %s203
        %p205 = pneg %p52
        %p206 = pneg %p49
        %s207 = smul.u32 2, %s22
        %p208 = scmp.lt.s32.totalorder %s21, 1
        %s209 = scalar_select %p208, %s21, 1
        %p210 = scmp.lt.s32.totalorder %s207, 1
        %s211 = scalar_select %p210, %s207, 1
        %s212 = smul.addr %s209, 2
        %s213 = sadd.s32 %s211, %s212
        %s214 = scalar_lea.vmem %s1, %s213
        %p215 = pneg %p80
        %p216 = pneg %p77
        %p217 = pneg %p101
        %p218 = pneg %p98
        %p219 = pneg %p129
        %p220 = pneg %p126
        %p221 = scmp.lt.s32.totalorder %s21, 1
        %s222 = scalar_select %p221, %s21, 1
        %p223 = scmp.lt.s32.totalorder %s22, 0
        %s224 = scalar_select %p223, %s22, 0
        %s225 = sadd.s32 %s224, %s222
        %s226 = scalar_lea.vmem %s3, %s225
        %s227 = smul.u32 2, %s22
        %s228 = smul.u32 2, %s22
        %p229 = scmp.lt.s32.totalorder %s21, 1
        %s230 = scalar_select %p229, %s21, 1
        %p231 = scmp.lt.s32.totalorder %s228, 1
        %s232 = scalar_select %p231, %s228, 1
        %s233 = smul.addr %s230, 2
        %s234 = sadd.s32 %s232, %s233
        %s235 = scalar_lea.vmem %s1, %s234
        %s236 = smul.u32 2, %s22
        %p237 = scmp.lt.s32.totalorder %s21, 1
        %s238 = scalar_select %p237, %s21, 1
        %p239 = scmp.lt.s32.totalorder %s22, 0
        %s240 = scalar_select %p239, %s22, 0
        %s241 = sadd.s32 %s240, %s238
        %s242 = scalar_lea.vmem %s3, %s241
        %v243 = vld [vmem:[%s195] sm:$0xff]
        %v244 = vld [vmem:[%s235] sm:$0x3]
        %v245 = vld [vmem:[%s2] sm:$0xf]
        %v247 = vcombine.high %v243, %v243
        %vm249 = vcmask 1043456
        %v250 = vsel %vm249, %v243, -inf
        %v251 = vrot.slane %v250, 4
        %v252 = vmax.f32 %v250, %v251
        %v253 = vrot.slane %v252, 2
        %v254 = vmax.f32 %v252, %v253
        %v255 = vrot.slane %v254, 1
        %v256 = vmax.f32 %v254, %v255
        %v257 = vsel %vm249, %v247, -inf
        %v258 = vrot.slane %v257, 4
        %v259 = vmax.f32 %v257, %v258
        %v260 = vrot.slane %v259, 2
        %v261 = vmax.f32 %v259, %v260
        %v262 = vrot.slane %v261, 1
        %v263 = vmax.f32 %v261, %v262
        %v266 = vcombine.low %v256, %v263
        %v268 = vsub.f32 %v243, %v266
        %v269 = vmul.f32 %v268, 1.442695
        %v270 = vpow.pop %v269
        %v272 = vcombine.high %v270, %v270
        %v274 = vsel %vm249, %v270, 0.0
        %v275 = vrot.slane %v274, 4
        %v276 = vadd.f32 %v274, %v275
        %v277 = vrot.slane %v276, 2
        %v278 = vadd.f32 %v276, %v277
        %v279 = vrot.slane %v278, 1
        %v280 = vadd.f32 %v278, %v279
        %v281 = vsel %vm249, %v272, 0.0
        %v282 = vrot.slane %v281, 4
        %v283 = vadd.f32 %v281, %v282
        %v284 = vrot.slane %v283, 2
        %v285 = vadd.f32 %v283, %v284
        %v286 = vrot.slane %v285, 1
        %v287 = vadd.f32 %v285, %v286
        %v288 = vlog2.pop %v280
        %v289 = vmul.f32 %v288, 0.6931472
        %v290 = vlog2.pop %v287
        %v291 = vmul.f32 %v290, 0.6931472
        %v292 = vlaneseq
        %v293 = vshrl.u32 %v292, 7
        %v294 = vlaneseq
        %v295 = vshrl.u32 %v294, 7
        %v296 = vsub.s32 0, %v295
        %v297 = vrot.slane %v244, %v296
        %v298 = vlaneseq
        %v299 = vshrl.u32 %v298, 7
        %v300 = vsub.s32 1, %v299
        %v301 = vrot.slane %v244, %v300
        %vm302 = vcmp.eq.s32.totalorder %v293, %v297
        %vm303 = vcmp.eq.s32.totalorder %v293, %v301
        %v305 = vcombine.high %v268, %v268
        %v307 = vsel %vm302, %v268, 0.0
        %v308 = vsel %vm303, %v305, 0.0
        %v309 = vsel %vm249, %v307, 0.0
        %v310 = vrot.slane %v309, 4
        %v311 = vadd.f32 %v309, %v310
        %v312 = vrot.slane %v311, 2
        %v313 = vadd.f32 %v311, %v312
        %v314 = vrot.slane %v313, 1
        %v315 = vadd.f32 %v313, %v314
        %v316 = vsel %vm249, %v308, 0.0
        %v317 = vrot.slane %v316, 4
        %v318 = vadd.f32 %v316, %v317
        %v319 = vrot.slane %v318, 2
        %v320 = vadd.f32 %v318, %v319
        %v321 = vrot.slane %v320, 1
        %v322 = vadd.f32 %v320, %v321
        %v323 = vsub.f32 %v315, %v289
        %v324 = vsub.f32 %v322, %v291
        %v325 = vsel %vm302, %v270, 0.0
        %v326 = vsel %vm303, %v272, 0.0
        %v327 = vsel %vm249, %v325, 0.0
        %v328 = vrot.slane %v327, 4
        %v329 = vadd.f32 %v327, %v328
        %v330 = vrot.slane %v329, 2
        %v331 = vadd.f32 %v329, %v330
        %v332 = vrot.slane %v331, 1
        %v333 = vadd.f32 %v331, %v332
        %v334 = vsel %vm249, %v326, 0.0
        %v335 = vrot.slane %v334, 4
        %v336 = vadd.f32 %v334, %v335
        %v337 = vrot.slane %v336, 2
        %v338 = vadd.f32 %v336, %v337
        %v339 = vrot.slane %v338, 1
        %v340 = vadd.f32 %v338, %v339
        %v341 = vrcp.pop %v280
        %v342 = vmul.f32 %v333, %v341
        %v343 = vrcp.pop %v287
        %v344 = vmul.f32 %v340, %v343
        %346 = vset.pattern.permute.xlu0 0
        %347 = vperm.xlu0 %346, %v245
        %v348 = vpop.permute.xlu0 %347
        %v350 = vsel %vm302, %v348, 0.0
        %v351 = vsel %vm303, %v348, 0.0
        %v352 = vsel %vm249, %v350, 0.0
        %v353 = vrot.slane %v352, 4
        %v354 = vadd.f32 %v352, %v353
        %v355 = vrot.slane %v354, 2
        %v356 = vadd.f32 %v354, %v355
        %v357 = vrot.slane %v356, 1
        %v358 = vadd.f32 %v356, %v357
        %v359 = vsel %vm249, %v351, 0.0
        %v360 = vrot.slane %v359, 4
        %v361 = vadd.f32 %v359, %v360
        %v362 = vrot.slane %v361, 2
        %v363 = vadd.f32 %v361, %v362
        %v364 = vrot.slane %v363, 1
        %v365 = vadd.f32 %v363, %v364
        %v366 = vmul.f32 %v323, %v358
        %v367 = vmul.f32 %v324, %v365
        %v368 = vsub.f32 1.0, %v342
        %v369 = vsub.f32 1.0, %v344
        %v370 = vmul.f32 %v368, %v368
        %v371 = vmul.f32 %v369, %v369
        %v372 = vmul.f32 %v370, %v366
        %v373 = vmul.f32 %v371, %v367
        %v374 = vsub.f32 0.0, %v372
        %v375 = vsub.f32 0.0, %v373
        %v376 = vadd.f32 %v374, %v375
        %377 = vadd.xlane.f32.xlu0 %v376
        %v378 = vpop.xlane.xlu0 %377
        %vm379 = vcmask 0
        %380 = vst.msk [vmem:[%s242] sm:$0x1] %vm379, %v378
        %p381 = scmp.lt.s32.totalorder %s21, 1
        %s382 = scalar_select %p381, %s21, 1
        %p383 = scmp.lt.s32.totalorder %s22, 0
        %s384 = scalar_select %p383, %s22, 0
        %s385 = sadd.s32 %s384, %s382
        %s386 = scalar_lea.vmem %s3, %s385
        // Predicated region
        $region37: #{tpu_custom_call.1} parent=31 // pred_check
          %p387 = pneg %p126
        $region38: #{tpu_custom_call.1} parent=31 // pred_check_branch
          %389 = sbr.rel (%p387) target = $region40
        $region39: #{tpu_custom_call.1} parent=31 // pred_region
          _
        $region40: #{tpu_custom_call.1} parent=31 // pred_fallthru
          _
      $region32: #{tpu_custom_call.1} parent=5 // pred_fallthru
        _
      %p390 = scmp.le.s32.totalorder 2, %s12
      // Predicated region
      $region41: #{tpu_custom_call.1} parent=5 // pred_check
        %p391 = pneg %p390
      $region42: #{tpu_custom_call.1} parent=5 // pred_check_branch
        %393 = sbr.rel (%p391) target = $region44
      $region43: #{tpu_custom_call.1} parent=5 // pred_region
        %s394 = ssub.s32 %s12, 2
        // Predicated region
        $region45: #{tpu_custom_call.1} parent=43 // pred_check
          %p395 = pneg %p132
        $region46: #{tpu_custom_call.1} parent=43 // pred_check_branch
          %397 = sbr.rel (%p395) target = $region48
        $region47: #{tpu_custom_call.1} parent=43 // pred_region
          %p398 = scmp.lt.s32.totalorder %s23, 1
          %s399 = scalar_select %p398, %s23, 1
          %p400 = scmp.lt.s32.totalorder %s24, 0
          %s401 = scalar_select %p400, %s24, 0
          %s402 = sadd.s32 %s401, %s399
          %s403 = scalar_lea.vmem %s3, %s402
        $region48: #{tpu_custom_call.1} parent=43 // pred_fallthru
          _
      $region44: #{tpu_custom_call.1} parent=5 // pred_fallthru
        _
    $region6: #{tpu_custom_call.1} parent=1 // loop_footer
      %s16 = sadd.s32 1, %s12
    $region7: #{tpu_custom_call.1} parent=1 // loop_footer_branch
      %11 = sbr.rel target = $region3
    $region8: #{tpu_custom_call.1} parent=1 // loop_exit
      _
    %404 = vsyncpa [#allocation3], 1
    %s405 = scalar_lea.sflag [#allocation3], 1
    %406 = vsyncpa %s405, 1

</llo_original>
